<compile_context>
chip_gen: v6e
topology: v6e:2x2x1
jax: 0.10.0
libtpu: 0.0.40
codegen_flags: <defaults>
</compile_context>

<pallas_src>
import jax
import jax.numpy as jnp
from jax.experimental import pallas as pl
from jax.experimental.pallas import tpu as pltpu

HIDDEN = 128
AUG_FEATS = 8          # 4 true features + ones(bias) row + 3 zero pad rows
EPOCH_DURATION = 3600.0


# ----------------------------------------------------------------------------
# Kernel: fused preamble + MLP (8->128->128) + collapsed logit-difference.
# All per-row tensors are feature-major / lane-dense: inputs and output are
# (1, TM), hidden activations are (HIDDEN, TM).
# ----------------------------------------------------------------------------
def _decoder_kernel(tw_s_ref, tw_e_ref, fd_ref, flag_ref,
                    w1_ref, w2_ref, b2_ref, wd_ref, bd_ref,
                    sel_ref, xbuf_ref):
    tw_s = tw_s_ref[...]                                   # (1, TM) f32
    tw_e = tw_e_ref[...]                                   # (1, TM) f32
    fd = fd_ref[...]                                       # (1, TM) f32

    # --- fused feature preamble (VPU, (1,TM)-sized -> rides for free) -------
    # rows: tw_s/1e4, tw_e/1e4, fd/1e3, helper/1e3, ones(bias), zero padding.
    xbuf_ref[0:1, :] = tw_s / 10000.0
    xbuf_ref[1:2, :] = tw_e / 10000.0
    xbuf_ref[2:3, :] = fd / 1000.0
    xbuf_ref[3:4, :] = (tw_e - fd - EPOCH_DURATION) / 1000.0
    xbuf_ref[4:5, :] = jnp.ones_like(tw_s)                 # picks up folded bias
    xbuf_ref[5:8, :] = jnp.zeros((3, tw_s.shape[1]), jnp.float32)

    x = xbuf_ref[...].astype(jnp.bfloat16)                 # (8, TM) bf16

    # layer 1: (128, 8) @ (8, TM) -> (128, TM); b1 + constant features are
    # folded into column 4 of W1aug, so no explicit bias add.
    h1 = jnp.dot(w1_ref[...], x, preferred_element_type=jnp.float32)
    h1 = jnp.maximum(h1, 0.0).astype(jnp.bfloat16)         # relu + bf16 for MXU

    # layer 2: (128, 128) @ (128, TM) -> (128, TM), f32 accumulation.
    h2 = jnp.dot(w2_ref[...], h1, preferred_element_type=jnp.float32)
    h2 = jnp.maximum(h2 + b2_ref[...], 0.0)                # relu

    # collapsed layer 3: logit difference (elementwise mul + sublane reduce;
    # intentionally NOT a 1-wide MXU pass -- see perf review).
    d = jnp.sum(h2 * wd_ref[...], axis=0, keepdims=True) + bd_ref[...]   # (1, TM)

    # greedy selection: -inf mask on class 0 forces class 1 when flag is set;
    # otherwise argmax(softmax(c*tanh(s))) == (s1 > s0) == (d > 0).
    sel_ref[...] = ((flag_ref[...] != 0) | (d > 0.0)).astype(jnp.int32)


# ----------------------------------------------------------------------------
# Tiling helpers
# ----------------------------------------------------------------------------
def _num_tensorcores():
    """Best-effort TensorCores-per-chip (v7x=2, v5e/v6e=1); any failure falls
    back to 1, which is always functionally correct."""
    try:
        info = pltpu.get_tpu_info()
        for name in ("num_cores", "core_count", "tensorcores_per_chip",
                     "num_tensorcores"):
            v = getattr(info, name, None)
            if isinstance(v, int) and v > 0:
                return v
    except Exception:
        pass
    try:
        v = getattr(jax.devices()[0], "num_cores", None)
        if isinstance(v, int) and v > 0:
            return v
    except Exception:
        pass
    return 1


def _pick_tm(m, num_cores=1):
    """Row tile (lane dim).  Target 4096 rows/step (~0.35us per-step overhead
    amortized, ~5-6 MiB VMEM).  Multi-TC chips get >= 2 grid steps per core;
    single-TC chips run one full-M tile when the problem is small."""
    target = 4096
    if num_cores > 1:
        per_core = (m // (2 * num_cores)) // 128 * 128
        target = min(target, max(128, per_core))
    if m <= target:
        return m              # full-width tile (allowed: equals the array dim)
    return target             # multiple of 128; ragged tail handled by Pallas


# ----------------------------------------------------------------------------
# pallas_call wrapper
# ----------------------------------------------------------------------------
def decoder_pallas(tw_s, tw_e, fd, flag, kparams, tm=None):
    """tw_s/tw_e/fd: [1, M] f32, flag: [1, M] int32. Returns int32 [M]."""
    w1aug, w2t, b2c, wd, bd = kparams
    M = tw_s.shape[1]
    if tm is None:
        tm = _pick_tm(M, _num_tensorcores())
    grid = (pl.cdiv(M, tm),)

    row = lambda i: (0, i)        # lane-dense per-row blocks
    whole = lambda i: (0, 0)      # grid-invariant weight blocks

    sel = pl.pallas_call(
        _decoder_kernel,
        out_shape=jax.ShapeDtypeStruct((1, M), jnp.int32),
        grid_spec=pltpu.PrefetchScalarGridSpec(
            num_scalar_prefetch=0,
            grid=grid,
            in_specs=[
                pl.BlockSpec((1, tm), row),                    # tw_start
                pl.BlockSpec((1, tm), row),                    # tw_end
                pl.BlockSpec((1, tm), row),                    # from_depot
                pl.BlockSpec((1, tm), row),                    # flag
                pl.BlockSpec((HIDDEN, AUG_FEATS), whole),      # W1aug (bf16)
                pl.BlockSpec((HIDDEN, HIDDEN), whole),         # W2^T (bf16)
                pl.BlockSpec((HIDDEN, 1), whole),              # b2
                pl.BlockSpec((HIDDEN, 1), whole),              # W3[:,1]-W3[:,0]
                pl.BlockSpec((1, 1), whole),                   # b3[1]-b3[0]
            ],
            out_specs=pl.BlockSpec((1, tm), row),              # lane-dense out
            scratch_shapes=[pltpu.VMEM((AUG_FEATS, tm), jnp.float32)],
        ),
        compiler_params=pltpu.CompilerParams(
            dimension_semantics=("parallel",)),
    )(tw_s, tw_e, fd, flag, w1aug, w2t, b2c, wd, bd)
    return sel[0]                                              # [M] int32


# ----------------------------------------------------------------------------
# Parameter prep: transposed bf16 weights, b1 + constant features folded into
# an augmented bias column, collapsed class-difference vector for W3/b3.
# ----------------------------------------------------------------------------
def prep_params(params, current_epoch, num_epochs):
    w1, b1, w2, b2, w3, b3 = params          # w1 (6,128), b1 (1,128), ...
    cur = jnp.asarray(current_epoch, jnp.float32) / 1.0
    nep = jnp.asarray(num_epochs, jnp.float32) / 1.0
    # constant features contribute a constant vector -> fold into the bias.
    b1_eff = b1.reshape(HIDDEN) + cur * w1[4] + nep * w1[5]            # (128,)
    w1aug = jnp.concatenate(
        [w1[0:4].T,                                                    # (128,4)
         b1_eff.reshape(HIDDEN, 1),                                    # bias col
         jnp.zeros((HIDDEN, 3), jnp.float32)], axis=1                  # padding
    ).astype(jnp.bfloat16)                                             # (128,8)
    w2t = w2.T.astype(jnp.bfloat16)                                    # (128,128)
    b2c = b2.reshape(HIDDEN, 1).astype(jnp.float32)
    wd = (w3[:, 1] - w3[:, 0]).reshape(HIDDEN, 1).astype(jnp.float32)
    bd = (b3[:, 1] - b3[:, 0]).reshape(1, 1).astype(jnp.float32)
    return w1aug, w2t, b2c, wd, bd


# ----------------------------------------------------------------------------
# DispatchModel.forward
# ----------------------------------------------------------------------------
def dispatch_model_forward(params, model_params, state):
    # Positive clipping keeps c*tanh monotone, so the greedy argmax over the
    # masked softmax equals the sign of the logit difference OR the flag.
    assert model_params["logit_clipping"] > 0
    if model_params["eval_type"] == "softmax":
        # TODO(synk): categorical sampling branch (torch.distributions) not
        # implemented; only the deterministic argmax path is here.
        raise NotImplementedError("softmax sampling path not implemented")

    flag = state["flag_really_must_dispatch"]
    B, P, N = flag.shape
    tw = state["time_windows"].astype(jnp.float32)          # [B,P,N,2]
    fd = state["from_depot"].astype(jnp.float32)            # [B,P,N,1]

    tw_s = tw[..., 0].reshape(1, -1)                         # (1, M) f32
    tw_e = tw[..., 1].reshape(1, -1)
    fd_r = fd[..., 0].reshape(1, -1)
    flag_r = flag.reshape(1, -1).astype(jnp.int32)

    kparams = prep_params(params, state["current_epoch"], state["num_epochs"])
    sel = decoder_pallas(tw_s, tw_e, fd_r, flag_r, kparams)  # (M,) int32
    return sel.reshape(B, P, N).astype(bool)                 # must_dispatch


# ----------------------------------------------------------------------------
# Pure-JAX reference mirroring the PyTorch module (tanh clipping, -inf mask,
# softmax, argmax).  The two big matmuls use the same bf16-input / f32-accum
# precision as the kernel so the comparison is apples-to-apples.
# Returns (must_dispatch, raw gap s1-s0, clipped gap) each shaped [B,P,N].
# ----------------------------------------------------------------------------
def reference_forward(params, model_params, state):
    w1, b1, w2, b2, w3, b3 = params
    flag = state["flag_really_must_dispatch"]
    B, P, N = flag.shape
    tw = state["time_windows"].astype(jnp.float32)
    fd = state["from_depot"].astype(jnp.float32)
    helper = tw[..., 1:2] - fd - EPOCH_DURATION
    cur = jnp.full_like(fd, state["current_epoch"] / 1)
    nep = jnp.full_like(fd, state["num_epochs"] / 1)
    input_cat = jnp.concatenate(
        [tw / 10000.0, fd / 1000.0, helper / 1000.0, cur, nep], axis=3)
    x = input_cat.reshape(-1, 6)

    def mm(a, bm):
        return jnp.dot(a.astype(jnp.bfloat16), bm.astype(jnp.bfloat16),
                       preferred_element_type=jnp.float32)

    h1 = jnp.maximum(mm(x, w1) + b1, 0.0)
    h2 = jnp.maximum(mm(h1, w2) + b2, 0.0)
    s = jnp.dot(h2, w3, preferred_element_type=jnp.float32) + b3   # (M, 2)

    c = jnp.float32(model_params["logit_clipping"])
    s_clip = c * jnp.tanh(s)
    flag_f = flag.reshape(-1)
    s_masked = jnp.stack(
        [jnp.where(flag_f, -jnp.inf, s_clip[:, 0]), s_clip[:, 1]], axis=-1)
    probs = jax.nn.softmax(s_masked, axis=-1)
    sel = jnp.argmax(probs, axis=-1).astype(bool)
    gap = (s[:, 1] - s[:, 0]).reshape(B, P, N)
    clip_gap = (s_clip[:, 1] - s_clip[:, 0]).reshape(B, P, N)
    return sel.reshape(B, P, N), gap, clip_gap


# ----------------------------------------------------------------------------
# Deterministic parameter init (PyTorch nn.Linear-style uniform bounds)
# ----------------------------------------------------------------------------
def init_params(key):
    def linear(kw, kb, fin, fout):
        bound = 1.0 / jnp.sqrt(jnp.float32(fin))
        w = jax.random.uniform(kw, (fin, fout), jnp.float32, -bound, bound)
        b = jax.random.uniform(kb, (1, fout), jnp.float32, -bound, bound)
        return w, b

    k = jax.random.split(key, 6)
    w1, b1 = linear(k[0], k[1], 6, HIDDEN)
    w2, b2 = linear(k[2], k[3], HIDDEN, HIDDEN)
    w3, b3 = linear(k[4], k[5], HIDDEN, 2)
    return (w1, b1, w2, b2, w3, b3)


if __name__ == "__main__":
    key = jax.random.PRNGKey(0)
    kp, k_tw, k_dur, k_fd, k_flag = jax.random.split(key, 5)

    model_params = {"logit_clipping": 10.0, "eval_type": "argmax"}
    params = init_params(kp)

    # small synthetic "state": B=2 batches, P=4 problems, N=64 nodes -> M=512
    B, P, N = 2, 4, 64
    tw_start = jax.random.uniform(k_tw, (B, P, N, 1), jnp.float32, 0.0, 20000.0)
    tw_end = tw_start + jax.random.uniform(k_dur, (B, P, N, 1), jnp.float32,
                                           1000.0, 10000.0)
    time_windows = jnp.concatenate([tw_start, tw_end], axis=3)       # [B,P,N,2]
    from_depot = jax.random.uniform(k_fd, (B, P, N, 1), jnp.float32, 0.0, 5000.0)
    flag_really_must_dispatch = jax.random.bernoulli(k_flag, 0.3, (B, P, N))

    state = {
        "time_windows": time_windows,
        "from_depot": from_depot,
        "current_epoch": 2,
        "num_epochs": 5,
        "flag_really_must_dispatch": flag_really_must_dispatch,
    }

    must_dispatch = dispatch_model_forward(params, model_params, state)
    must_dispatch = jax.block_until_ready(must_dispatch)
    assert must_dispatch.shape == (B, P, N) and must_dispatch.dtype == jnp.bool_

    ref_sel, ref_gap, ref_clip_gap = reference_forward(params, model_params, state)

    # Agreement with module semantics on numerically-robust rows.  Excluded:
    #  * |raw gap| small  -> bf16/rounding-order sensitive decisions
    #  * |clipped gap| ~0 -> tanh-saturation ties where the module's argmax
    #    picks class 0 by first-index convention.
    confident = (jnp.abs(ref_gap) > 5e-2) & (jnp.abs(ref_clip_gap) > 1e-3)
    assert bool(jnp.all(jnp.where(confident, must_dispatch == ref_sel, True))), \
        "mismatch vs reference on confident rows"

    # flagged rows must always dispatch (class-0 logit is masked to -inf)
    assert bool(jnp.all(jnp.where(flag_really_must_dispatch, must_dispatch, True)))

    print("KERNEL_OK")
</pallas_src>

<mosaic_0001>
module attributes {stable_mosaic.version = 11 : i64} {
  func.func @_decoder_kernel(%arg0: i32, %arg1: memref<1x512xf32, #tpu.memory_space<vmem>>, %arg2: memref<1x512xf32, #tpu.memory_space<vmem>>, %arg3: memref<1x512xf32, #tpu.memory_space<vmem>>, %arg4: memref<1x512xi32, #tpu.memory_space<vmem>>, %arg5: memref<128x8xbf16, #tpu.memory_space<vmem>>, %arg6: memref<128x128xbf16, #tpu.memory_space<vmem>>, %arg7: memref<128x1xf32, #tpu.memory_space<vmem>>, %arg8: memref<128x1xf32, #tpu.memory_space<vmem>>, %arg9: memref<1x1xf32, #tpu.memory_space<vmem>>, %arg10: memref<1x512xi32, #tpu.memory_space<vmem>>, %arg11: memref<8x512xf32, #tpu.memory_space<vmem>>) attributes {dimension_semantics = [#tpu.dimension_semantics<parallel>], iteration_bounds = array<i64: 1>, scalar_prefetch = 0 : i64, scratch_operands = 1 : i64, tpu.core_type = #tpu.core_type<tc>, window_params = [{transform_indices = @transform_0, window_bounds = array<i64: 1, 512>}, {transform_indices = @transform_1, window_bounds = array<i64: 1, 512>}, {transform_indices = @transform_2, window_bounds = array<i64: 1, 512>}, {transform_indices = @transform_3, window_bounds = array<i64: 1, 512>}, {pipeline_mode = #tpu.pipeline_mode<synchronous>, transform_indices = @transform_4, window_bounds = array<i64: 128, 8>}, {pipeline_mode = #tpu.pipeline_mode<synchronous>, transform_indices = @transform_5, window_bounds = array<i64: 128, 128>}, {pipeline_mode = #tpu.pipeline_mode<synchronous>, transform_indices = @transform_6, window_bounds = array<i64: 128, 1>}, {pipeline_mode = #tpu.pipeline_mode<synchronous>, transform_indices = @transform_7, window_bounds = array<i64: 128, 1>}, {pipeline_mode = #tpu.pipeline_mode<synchronous>, transform_indices = @transform_8, window_bounds = array<i64: 1, 1>}, {transform_indices = @transform_9, window_bounds = array<i64: 1, 512>}]} {
    %c0 = arith.constant 0 : index
    %c0_0 = arith.constant 0 : index
    %0 = vector.load %arg1[%c0, %c0_0] : memref<1x512xf32, #tpu.memory_space<vmem>>, vector<1x512xf32>
    %c0_1 = arith.constant 0 : index
    %c0_2 = arith.constant 0 : index
    %1 = vector.load %arg2[%c0_1, %c0_2] : memref<1x512xf32, #tpu.memory_space<vmem>>, vector<1x512xf32>
    %c0_3 = arith.constant 0 : index
    %c0_4 = arith.constant 0 : index
    %2 = vector.load %arg3[%c0_3, %c0_4] : memref<1x512xf32, #tpu.memory_space<vmem>>, vector<1x512xf32>
    %cst = arith.constant 1.000000e+04 : f32
    %3 = vector.broadcast %cst : f32 to vector<1x512xf32>
    %4 = arith.divf %0, %3 : vector<1x512xf32>
    %c0_5 = arith.constant 0 : index
    %c0_6 = arith.constant 0 : index
    %5 = vector.load %arg11[%c0_5, %c0_6] : memref<8x512xf32, #tpu.memory_space<vmem>>, vector<1x512xf32>
    tpu.vector_store %arg11[%c0_5, %c0_6], %4 {strides = array<i32>} : memref<8x512xf32, #tpu.memory_space<vmem>>, vector<1x512xf32>,
    %cst_7 = arith.constant 1.000000e+04 : f32
    %6 = vector.broadcast %cst_7 : f32 to vector<1x512xf32>
    %7 = arith.divf %1, %6 : vector<1x512xf32>
    %c1 = arith.constant 1 : index
    %c0_8 = arith.constant 0 : index
    %8 = vector.load %arg11[%c1, %c0_8] : memref<8x512xf32, #tpu.memory_space<vmem>>, vector<1x512xf32>
    tpu.vector_store %arg11[%c1, %c0_8], %7 {strides = array<i32>} : memref<8x512xf32, #tpu.memory_space<vmem>>, vector<1x512xf32>,
    %cst_9 = arith.constant 1.000000e+03 : f32
    %9 = vector.broadcast %cst_9 : f32 to vector<1x512xf32>
    %10 = arith.divf %2, %9 : vector<1x512xf32>
    %c2 = arith.constant 2 : index
    %c0_10 = arith.constant 0 : index
    %11 = vector.load %arg11[%c2, %c0_10] : memref<8x512xf32, #tpu.memory_space<vmem>>, vector<1x512xf32>
    tpu.vector_store %arg11[%c2, %c0_10], %10 {strides = array<i32>} : memref<8x512xf32, #tpu.memory_space<vmem>>, vector<1x512xf32>,
    %12 = arith.subf %1, %2 : vector<1x512xf32>
    %cst_11 = arith.constant 3.600000e+03 : f32
    %13 = vector.broadcast %cst_11 : f32 to vector<1x512xf32>
    %14 = arith.subf %12, %13 : vector<1x512xf32>
    %cst_12 = arith.constant 1.000000e+03 : f32
    %15 = vector.broadcast %cst_12 : f32 to vector<1x512xf32>
    %16 = arith.divf %14, %15 : vector<1x512xf32>
    %c3 = arith.constant 3 : index
    %c0_13 = arith.constant 0 : index
    %17 = vector.load %arg11[%c3, %c0_13] : memref<8x512xf32, #tpu.memory_space<vmem>>, vector<1x512xf32>
    tpu.vector_store %arg11[%c3, %c0_13], %16 {strides = array<i32>} : memref<8x512xf32, #tpu.memory_space<vmem>>, vector<1x512xf32>,
    %cst_14 = arith.constant 1.000000e+00 : f32
    %18 = vector.broadcast %cst_14 : f32 to vector<1x512xf32>
    %c4 = arith.constant 4 : index
    %c0_15 = arith.constant 0 : index
    %19 = vector.load %arg11[%c4, %c0_15] : memref<8x512xf32, #tpu.memory_space<vmem>>, vector<1x512xf32>
    tpu.vector_store %arg11[%c4, %c0_15], %18 {strides = array<i32>} : memref<8x512xf32, #tpu.memory_space<vmem>>, vector<1x512xf32>,
    %cst_16 = arith.constant 0.000000e+00 : f32
    %20 = vector.broadcast %cst_16 : f32 to vector<3x512xf32>
    %c5 = arith.constant 5 : index
    %c0_17 = arith.constant 0 : index
    %21 = vector.load %arg11[%c5, %c0_17] : memref<8x512xf32, #tpu.memory_space<vmem>>, vector<3x512xf32>
    tpu.vector_store %arg11[%c5, %c0_17], %20 {strides = array<i32>} : memref<8x512xf32, #tpu.memory_space<vmem>>, vector<3x512xf32>,
    %c0_18 = arith.constant 0 : index
    %c0_19 = arith.constant 0 : index
    %22 = vector.load %arg11[%c0_18, %c0_19] : memref<8x512xf32, #tpu.memory_space<vmem>>, vector<8x512xf32>
    %23 = arith.truncf %22 : vector<8x512xf32> to vector<8x512xbf16>
    %c0_20 = arith.constant 0 : index
    %c0_21 = arith.constant 0 : index
    %24 = vector.load %arg5[%c0_20, %c0_21] : memref<128x8xbf16, #tpu.memory_space<vmem>>, vector<128x8xbf16>
    %cst_22 = arith.constant dense<0.000000e+00> : vector<128x512xf32>
    %25 = tpu.matmul %24, %23, %cst_22 {dimension_numbers = #tpu.dot_dimension_numbers<[1], [0], [0], [1], [0, 0, 1, 1], [], []>} : vector<128x8xbf16>, vector<8x512xbf16>, vector<128x512xf32> -> vector<128x512xf32>
    %cst_23 = arith.constant 0.000000e+00 : f32
    %26 = vector.broadcast %cst_23 : f32 to vector<128x512xf32>
    %27 = arith.maximumf %25, %26 : vector<128x512xf32>
    %28 = arith.truncf %27 : vector<128x512xf32> to vector<128x512xbf16>
    %c0_24 = arith.constant 0 : index
    %c0_25 = arith.constant 0 : index
    %29 = vector.load %arg6[%c0_24, %c0_25] : memref<128x128xbf16, #tpu.memory_space<vmem>>, vector<128x128xbf16>
    %cst_26 = arith.constant dense<0.000000e+00> : vector<128x512xf32>
    %30 = tpu.matmul %29, %28, %cst_26 {dimension_numbers = #tpu.dot_dimension_numbers<[1], [0], [0], [1], [0, 0, 1, 1], [], []>} : vector<128x128xbf16>, vector<128x512xbf16>, vector<128x512xf32> -> vector<128x512xf32>
    %c0_27 = arith.constant 0 : index
    %c0_28 = arith.constant 0 : index
    %31 = vector.load %arg7[%c0_27, %c0_28] : memref<128x1xf32, #tpu.memory_space<vmem>>, vector<128x1xf32>
    %32 = vector.broadcast %31 : vector<128x1xf32> to vector<128x512xf32>
    %33 = arith.addf %30, %32 : vector<128x512xf32>
    %cst_29 = arith.constant 0.000000e+00 : f32
    %34 = vector.broadcast %cst_29 : f32 to vector<128x512xf32>
    %35 = arith.maximumf %33, %34 : vector<128x512xf32>
    %c0_30 = arith.constant 0 : index
    %c0_31 = arith.constant 0 : index
    %36 = vector.load %arg8[%c0_30, %c0_31] : memref<128x1xf32, #tpu.memory_space<vmem>>, vector<128x1xf32>
    %37 = vector.broadcast %36 : vector<128x1xf32> to vector<128x512xf32>
    %38 = arith.mulf %35, %37 : vector<128x512xf32>
    %cst_32 = arith.constant dense<0.000000e+00> : vector<512xf32>
    %39 = vector.multi_reduction <add>, %38, %cst_32 [0] : vector<128x512xf32> to vector<512xf32>
    %40 = vector.shape_cast %39 : vector<512xf32> to vector<1x512xf32>
    %c0_33 = arith.constant 0 : index
    %c0_34 = arith.constant 0 : index
    %41 = vector.load %arg9[%c0_33, %c0_34] : memref<1x1xf32, #tpu.memory_space<vmem>>, vector<1x1xf32>
    %42 = vector.broadcast %41 : vector<1x1xf32> to vector<1x512xf32>
    %43 = arith.addf %40, %42 : vector<1x512xf32>
    %c0_35 = arith.constant 0 : index
    %c0_36 = arith.constant 0 : index
    %44 = vector.load %arg4[%c0_35, %c0_36] : memref<1x512xi32, #tpu.memory_space<vmem>>, vector<1x512xi32>
    %c0_i32 = arith.constant 0 : i32
    %45 = vector.broadcast %c0_i32 : i32 to vector<1x512xi32>
    %46 = arith.cmpi ne, %44, %45 : vector<1x512xi32>
    %cst_37 = arith.constant 0.000000e+00 : f32
    %47 = vector.broadcast %cst_37 : f32 to vector<1x512xf32>
    %48 = arith.cmpf ogt, %43, %47 : vector<1x512xf32>
    %49 = arith.ori %46, %48 : vector<1x512xi1>
    %50 = arith.extui %49 : vector<1x512xi1> to vector<1x512xi32>
    %c0_38 = arith.constant 0 : index
    %c0_39 = arith.constant 0 : index
    %51 = vector.load %arg10[%c0_38, %c0_39] : memref<1x512xi32, #tpu.memory_space<vmem>>, vector<1x512xi32>
    tpu.vector_store %arg10[%c0_38, %c0_39], %50 {strides = array<i32>} : memref<1x512xi32, #tpu.memory_space<vmem>>, vector<1x512xi32>,
    return
  }
  func.func @transform_0(%arg0: i32) -> (i32, i32) {
    %c0_i32 = arith.constant 0 : i32
    %c0_i32_0 = arith.constant 0 : i32
    return %c0_i32, %arg0 : i32, i32
  }
  func.func @transform_1(%arg0: i32) -> (i32, i32) {
    %c0_i32 = arith.constant 0 : i32
    %c0_i32_0 = arith.constant 0 : i32
    return %c0_i32, %arg0 : i32, i32
  }
  func.func @transform_2(%arg0: i32) -> (i32, i32) {
    %c0_i32 = arith.constant 0 : i32
    %c0_i32_0 = arith.constant 0 : i32
    return %c0_i32, %arg0 : i32, i32
  }
  func.func @transform_3(%arg0: i32) -> (i32, i32) {
    %c0_i32 = arith.constant 0 : i32
    %c0_i32_0 = arith.constant 0 : i32
    return %c0_i32, %arg0 : i32, i32
  }
  func.func @transform_4(%arg0: i32) -> (i32, i32) {
    %c0_i32 = arith.constant 0 : i32
    %c0_i32_0 = arith.constant 0 : i32
    %c0_i32_1 = arith.constant 0 : i32
    return %c0_i32, %c0_i32_0 : i32, i32
  }
  func.func @transform_5(%arg0: i32) -> (i32, i32) {
    %c0_i32 = arith.constant 0 : i32
    %c0_i32_0 = arith.constant 0 : i32
    %c0_i32_1 = arith.constant 0 : i32
    return %c0_i32, %c0_i32_0 : i32, i32
  }
  func.func @transform_6(%arg0: i32) -> (i32, i32) {
    %c0_i32 = arith.constant 0 : i32
    %c0_i32_0 = arith.constant 0 : i32
    %c0_i32_1 = arith.constant 0 : i32
    return %c0_i32, %c0_i32_0 : i32, i32
  }
  func.func @transform_7(%arg0: i32) -> (i32, i32) {
    %c0_i32 = arith.constant 0 : i32
    %c0_i32_0 = arith.constant 0 : i32
    %c0_i32_1 = arith.constant 0 : i32
    return %c0_i32, %c0_i32_0 : i32, i32
  }
  func.func @transform_8(%arg0: i32) -> (i32, i32) {
    %c0_i32 = arith.constant 0 : i32
    %c0_i32_0 = arith.constant 0 : i32
    %c0_i32_1 = arith.constant 0 : i32
    return %c0_i32, %c0_i32_0 : i32, i32
  }
  func.func @transform_9(%arg0: i32) -> (i32, i32) {
    %c0_i32 = arith.constant 0 : i32
    %c0_i32_0 = arith.constant 0 : i32
    return %c0_i32, %arg0 : i32, i32
  }
}

</mosaic_0001>

<llo_original>
// kernel: tpu_custom_call.1
$region0: #{tpu_custom_call.1}
  #allocation0 [shape = 'u32[]', space=smem, size = 0x4, offset = 0x4, fixed_abs, tag = 'smem constant byte address 0x4 - core index']
  #allocation1 [shape = 'u32[144,128]{1,0:T(1,128)}', space=vmem, size = 0x12000, scoped, tag = 'internal scratch']
  #allocation2 [shape = 'f32[8,512]{1,0:T(8,128)}', space=vmem, size = 0x4000, scoped, tag = 'scratch operand']
  #allocation3 [shape = 'f32[1,1]{1,0:T(1,128)S(1)}', space=vmem, size = 0x200, scoped, tag = 'scoped memory for tpu_custom_call.1']
  %s0 = inlined_call_operand.vmem [shape: f32[1,512], index: 0, kind: input, shape index: {}]
  %s1 = inlined_call_operand.vmem [shape: f32[1,512], index: 1, kind: input, shape index: {}]
  %s2 = inlined_call_operand.vmem [shape: f32[1,512], index: 2, kind: input, shape index: {}]
  %s3 = inlined_call_operand.vmem [shape: s32[1,512], index: 3, kind: input, shape index: {}]
  %s4 = inlined_call_operand.vmem [shape: bf16[128,8], index: 4, kind: input, shape index: {}]
  %s5 = inlined_call_operand.vmem [shape: bf16[128,128], index: 5, kind: input, shape index: {}]
  %s6 = inlined_call_operand.vmem [shape: f32[128,1], index: 6, kind: input, shape index: {}]
  %s7 = inlined_call_operand.vmem [shape: f32[128,1], index: 7, kind: input, shape index: {}]
  %s8 = inlined_call_operand.<no memory space> [shape: f32[1,1], index: 8, kind: input, shape index: {}]
  %s9 = inlined_call_operand.hbm [shape: s32[1,512], index: 9, kind: output, shape index: {}]
  %s10 = sld [smem:[#allocation0]]
  $region46: #{tpu_custom_call.1} parent=0
    _
  %s12 = ssub.s32 1, %s10
  %s13 = scalar_select 0, %s12, %s10
  %v14 = vstv %s8
  %15 = vst [vmem:[#allocation3] sm:$0x1] %v14
  $region1: #{tpu_custom_call.1} parent=0
    #allocation4 [shape = 'u8[2048]{0}', space=vmem, size = 0x800, scoped, tag = 'output window, operand 0, single buffered']
    #allocation5 [shape = 's32[1]{0}', space=sflag, size = 0x4, scoped, tag = 'scoped memory for tpu_custom_call.1']
    %16 = vsyncpa [#allocation5], 0
    // Predicated region
    $region2: #{tpu_custom_call.1} parent=1 // pred_check
      _
    $region3: #{tpu_custom_call.1} parent=1 // pred_check_branch
      %18 = sbr.rel (0) target = $region5
    $region4: #{tpu_custom_call.1} parent=1 // pred_region
      _
    $region5: #{tpu_custom_call.1} parent=1 // pred_fallthru
      _
    // Predicated region
    $region6: #{tpu_custom_call.1} parent=1 // pred_check
      _
    $region7: #{tpu_custom_call.1} parent=1 // pred_check_branch
      %20 = sbr.rel (0) target = $region9
    $region8: #{tpu_custom_call.1} parent=1 // pred_region
      _
    $region9: #{tpu_custom_call.1} parent=1 // pred_fallthru
      _
    // Predicated region
    $region10: #{tpu_custom_call.1} parent=1 // pred_check
      _
    $region11: #{tpu_custom_call.1} parent=1 // pred_check_branch
      %22 = sbr.rel (0) target = $region13
    $region12: #{tpu_custom_call.1} parent=1 // pred_region
      _
    $region13: #{tpu_custom_call.1} parent=1 // pred_fallthru
      _
    // Predicated region
    $region14: #{tpu_custom_call.1} parent=1 // pred_check
      _
    $region15: #{tpu_custom_call.1} parent=1 // pred_check_branch
      %24 = sbr.rel (0) target = $region17
    $region16: #{tpu_custom_call.1} parent=1 // pred_region
      _
    $region17: #{tpu_custom_call.1} parent=1 // pred_fallthru
      _
    // Predicated region
    $region18: #{tpu_custom_call.1} parent=1 // pred_check
      _
    $region19: #{tpu_custom_call.1} parent=1 // pred_check_branch
      %26 = sbr.rel (0) target = $region21
    $region20: #{tpu_custom_call.1} parent=1 // pred_region
      _
    $region21: #{tpu_custom_call.1} parent=1 // pred_fallthru
      _
    // Predicated region
    $region22: #{tpu_custom_call.1} parent=1 // pred_check
      _
    $region23: #{tpu_custom_call.1} parent=1 // pred_check_branch
      %28 = sbr.rel (0) target = $region25
    $region24: #{tpu_custom_call.1} parent=1 // pred_region
      _
    $region25: #{tpu_custom_call.1} parent=1 // pred_fallthru
      _
    // Predicated region
    $region26: #{tpu_custom_call.1} parent=1 // pred_check
      _
    $region27: #{tpu_custom_call.1} parent=1 // pred_check_branch
      %30 = sbr.rel (0) target = $region29
    $region28: #{tpu_custom_call.1} parent=1 // pred_region
      _
    $region29: #{tpu_custom_call.1} parent=1 // pred_fallthru
      _
    // Predicated region
    $region30: #{tpu_custom_call.1} parent=1 // pred_check
      _
    $region31: #{tpu_custom_call.1} parent=1 // pred_check_branch
      %32 = sbr.rel (0) target = $region33
    $region32: #{tpu_custom_call.1} parent=1 // pred_region
      _
    $region33: #{tpu_custom_call.1} parent=1 // pred_fallthru
      _
    // Predicated region
    $region34: #{tpu_custom_call.1} parent=1 // pred_check
      _
    $region35: #{tpu_custom_call.1} parent=1 // pred_check_branch
      %34 = sbr.rel (0) target = $region37
    $region36: #{tpu_custom_call.1} parent=1 // pred_region
      _
    $region37: #{tpu_custom_call.1} parent=1 // pred_fallthru
      _
    %v36 = vld [vmem:[%s0] sm:$0xf]
    %v37 = vld [vmem:[%s1] sm:$0xf]
    %v38 = vld [vmem:[%s2] sm:$0xf]
    %v39 = vrcp.pop 10000.0
    %v40 = vmul.f32 %v36, %v39
    %v41 = vlaneseq
    %vm42 = vcmp.ge.s32.totalorder %v41, 0
    %vm43 = vcmp.lt.s32.totalorder %v41, 512
    %vm44 = vmand %vm42, %vm43
    %45 = vst.msk [vmem:[#allocation2] ss:$8 sm:$0xf] %vm44, %v40
    %46 = vst.msk [vmem:[#allocation2] ss:$8 sm:$0x0] %vm44, %v40
    %v47 = vmul.f32 %v37, %v39
    %s48 = scalar_lea.vmem [#allocation2], 1
    %49 = vst.msk [vmem:[%s48] ss:$8 sm:$0xf] %vm44, %v47
    %50 = vst.msk [vmem:[%s48] ss:$8 sm:$0x0] %vm44, %v47
    %v51 = vrcp.pop 1000.0
    %v52 = vmul.f32 %v38, %v51
    %s53 = scalar_lea.vmem [#allocation2], 2
    %54 = vst.msk [vmem:[%s53] ss:$8 sm:$0xf] %vm44, %v52
    %55 = vst.msk [vmem:[%s53] ss:$8 sm:$0x0] %vm44, %v52
    %v56 = vsub.f32 %v37, %v38
    %v57 = vsub.f32 %v56, 3600.0
    %v58 = vmul.f32 %v57, %v51
    %s59 = scalar_lea.vmem [#allocation2], 3
    %60 = vst.msk [vmem:[%s59] ss:$8 sm:$0xf] %vm44, %v58
    %61 = vst.msk [vmem:[%s59] ss:$8 sm:$0x0] %vm44, %v58
    %s62 = scalar_lea.vmem [#allocation2], 4
    %63 = vst.msk [vmem:[%s62] ss:$8 sm:$0xf] %vm44, 1.0
    %64 = vst.msk [vmem:[%s62] ss:$8 sm:$0x0] %vm44, 1.0
    %65 = vst [vmem:[#allocation2] sm:$0xe0] 0.0
    %66 = vst [vmem:[#allocation2 + $0x8] sm:$0xe0] 0.0
    %67 = vst [vmem:[#allocation2 + $0x10] sm:$0xe0] 0.0
    %68 = vst [vmem:[#allocation2 + $0x18] sm:$0xe0] 0.0
    %v69 = vld [vmem:[#allocation2] sm:$0xff]
    %v70 = vld [vmem:[#allocation2 + $0x8] sm:$0xff]
    %v71 = vld [vmem:[#allocation2 + $0x10] sm:$0xff]
    %v72 = vld [vmem:[#allocation2 + $0x18] sm:$0xff]
    %v73 = vpack.c.bf16 %v69, %v69
    %v74 = vpack.c.bf16 %v70, %v70
    %v75 = vpack.c.bf16 %v71, %v71
    %v76 = vpack.c.bf16 %v72, %v72
    %v77 = vld [vmem:[%s4] sm:$0xf]
    %v78 = vld [vmem:[%s4 + $0x4] sm:$0xf]
    %v79 = vld [vmem:[%s4 + $0x8] sm:$0xf]
    %v80 = vld [vmem:[%s4 + $0xc] sm:$0xf]
    %v81 = vld [vmem:[%s4 + $0x10] sm:$0xf]
    %v82 = vld [vmem:[%s4 + $0x14] sm:$0xf]
    %v83 = vld [vmem:[%s4 + $0x18] sm:$0xf]
    %v84 = vld [vmem:[%s4 + $0x1c] sm:$0xf]
    %v85 = vld [vmem:[%s4 + $0x20] sm:$0xf]
    %v86 = vld [vmem:[%s4 + $0x24] sm:$0xf]
    %v87 = vld [vmem:[%s4 + $0x28] sm:$0xf]
    %v88 = vld [vmem:[%s4 + $0x2c] sm:$0xf]
    %v89 = vld [vmem:[%s4 + $0x30] sm:$0xf]
    %v90 = vld [vmem:[%s4 + $0x34] sm:$0xf]
    %v91 = vld [vmem:[%s4 + $0x38] sm:$0xf]
    %v92 = vld [vmem:[%s4 + $0x3c] sm:$0xf]
    %v109 = vunpack.c.l.b16 %v77
    %v110 = vunpack.c.l.b16 %v78
    %v111 = vunpack.c.l.b16 %v79
    %v112 = vunpack.c.l.b16 %v80
    %v113 = vunpack.c.l.b16 %v81
    %v114 = vunpack.c.l.b16 %v82
    %v115 = vunpack.c.l.b16 %v83
    %v116 = vunpack.c.l.b16 %v84
    %v117 = vunpack.c.l.b16 %v85
    %v118 = vunpack.c.l.b16 %v86
    %v119 = vunpack.c.l.b16 %v87
    %v120 = vunpack.c.l.b16 %v88
    %v121 = vunpack.c.l.b16 %v89
    %v122 = vunpack.c.l.b16 %v90
    %v123 = vunpack.c.l.b16 %v91
    %v124 = vunpack.c.l.b16 %v92
    %v125 = vpack.c.b16 %v110, %v109
    %v126 = vpack.c.b16 %v112, %v111
    %v127 = vpack.c.b16 %v114, %v113
    %v128 = vpack.c.b16 %v116, %v115
    %v129 = vpack.c.b16 %v118, %v117
    %v130 = vpack.c.b16 %v120, %v119
    %v131 = vpack.c.b16 %v122, %v121
    %v132 = vpack.c.b16 %v124, %v123
    %vm133 = vcmask 64512
    %v135 = vsel %vm133, %v125, 0
    %v138 = vsel %vm133, %v126, 0
    %v141 = vsel %vm133, %v127, 0
    %v144 = vsel %vm133, %v128, 0
    %v147 = vsel %vm133, %v129, 0
    %v150 = vsel %vm133, %v130, 0
    %v153 = vsel %vm133, %v131, 0
    %v156 = vsel %vm133, %v132, 0
    %vm158 = vcmask 1043456
    %v160 = vsel %vm158, %v73, 0
    %v163 = vsel %vm158, %v74, 0
    %v166 = vsel %vm158, %v75, 0
    %v169 = vsel %vm158, %v76, 0
    %171 = vmatprep.subr.bf16.mxu0 0
    %172 = vmatpush1.bf16.msra.mxu0 0
    %173 = vmatprep.subr.bf16.mxu0 0
    %174 = vmatpush1.bf16.msra.mxu0 0
    %175 = vmatprep.subr.bf16.mxu0 0
    %176 = vmatpush1.bf16.msra.mxu0 0
    %177 = vmatprep.subr.bf16.mxu0 0
    %178 = vmatpush1.bf16.msra.mxu0 0
    %179 = vmatprep.subr.bf16.mxu0 0
    %180 = vmatpush1.bf16.msra.mxu0 0
    %181 = vmatprep.subr.bf16.mxu0 0
    %182 = vmatpush1.bf16.msra.mxu0 0
    %183 = vmatprep.subr.bf16.mxu0 0
    %184 = vmatpush1.bf16.msra.mxu0 0
    %185 = vmatprep.subr.bf16.mxu0 %v163
    %186 = vmatpush1.bf16.msra.mxu0 %v160
    %187 = vmatprep.subr.bf16.mxu0 0
    %188 = vmatpush2.bf16.msra.mxu0 0
    %189 = vmatprep.subr.bf16.mxu0 0
    %190 = vmatpush2.bf16.msra.mxu0 0
    %191 = vmatprep.subr.bf16.mxu0 0
    %192 = vmatpush2.bf16.msra.mxu0 0
    %193 = vmatprep.subr.bf16.mxu0 0
    %194 = vmatpush2.bf16.msra.mxu0 0
    %195 = vmatprep.subr.bf16.mxu0 0
    %196 = vmatpush2.bf16.msra.mxu0 0
    %197 = vmatprep.subr.bf16.mxu0 0
    %198 = vmatpush2.bf16.msra.mxu0 0
    %199 = vmatprep.subr.bf16.mxu0 0
    %200 = vmatpush2.bf16.msra.mxu0 0
    %201 = vmatprep.subr.bf16.mxu0 0
    %202 = vmatpush2.bf16.msra.mxu0 0
    %203 = vmatprep.mubr.bf16.mxu0 0
    %204 = vmatmul.mubr.bf16.gmra.mxu0 %v135
    %v205 = vpop.f32.mrf.mxu0
    %v206 = vadd.f32 0.0, %v205
    %v207 = vpop.f32.mrf.mxu0
    %v208 = vadd.f32 0.0, %v207
    %v209 = vpop.f32.mrf.mxu0
    %v210 = vadd.f32 0.0, %v209
    %v211 = vpop.f32.mrf.mxu0
    %v212 = vadd.f32 0.0, %v211
    %213 = vmatprep.mubr.bf16.mxu0 0
    %214 = vmatmul.mubr.bf16.gmra.mxu0 %v138
    %v215 = vpop.f32.mrf.mxu0
    %v216 = vadd.f32 0.0, %v215
    %v217 = vpop.f32.mrf.mxu0
    %v218 = vadd.f32 0.0, %v217
    %v219 = vpop.f32.mrf.mxu0
    %v220 = vadd.f32 0.0, %v219
    %v221 = vpop.f32.mrf.mxu0
    %v222 = vadd.f32 0.0, %v221
    %223 = vmatprep.mubr.bf16.mxu0 0
    %224 = vmatmul.mubr.bf16.gmra.mxu0 %v141
    %v225 = vpop.f32.mrf.mxu0
    %v226 = vadd.f32 0.0, %v225
    %v227 = vpop.f32.mrf.mxu0
    %v228 = vadd.f32 0.0, %v227
    %v229 = vpop.f32.mrf.mxu0
    %v230 = vadd.f32 0.0, %v229
    %v231 = vpop.f32.mrf.mxu0
    %v232 = vadd.f32 0.0, %v231
    %233 = vmatprep.mubr.bf16.mxu0 0
    %234 = vmatmul.mubr.bf16.gmra.mxu0 %v144
    %v235 = vpop.f32.mrf.mxu0
    %v236 = vadd.f32 0.0, %v235
    %v237 = vpop.f32.mrf.mxu0
    %v238 = vadd.f32 0.0, %v237
    %v239 = vpop.f32.mrf.mxu0
    %v240 = vadd.f32 0.0, %v239
    %v241 = vpop.f32.mrf.mxu0
    %v242 = vadd.f32 0.0, %v241
    %243 = vmatprep.mubr.bf16.mxu0 0
    %244 = vmatmul.mubr.bf16.gmra.mxu0 %v147
    %v245 = vpop.f32.mrf.mxu0
    %v246 = vadd.f32 0.0, %v245
    %v247 = vpop.f32.mrf.mxu0
    %v248 = vadd.f32 0.0, %v247
    %v249 = vpop.f32.mrf.mxu0
    %v250 = vadd.f32 0.0, %v249
    %v251 = vpop.f32.mrf.mxu0
    %v252 = vadd.f32 0.0, %v251
    %253 = vmatprep.mubr.bf16.mxu0 0
    %254 = vmatmul.mubr.bf16.gmra.mxu0 %v150
    %v255 = vpop.f32.mrf.mxu0
    %v256 = vadd.f32 0.0, %v255
    %v257 = vpop.f32.mrf.mxu0
    %v258 = vadd.f32 0.0, %v257
    %v259 = vpop.f32.mrf.mxu0
    %v260 = vadd.f32 0.0, %v259
    %v261 = vpop.f32.mrf.mxu0
    %v262 = vadd.f32 0.0, %v261
    %263 = vmatprep.mubr.bf16.mxu0 0
    %264 = vmatmul.mubr.bf16.gmra.mxu0 %v153
    %v265 = vpop.f32.mrf.mxu0
    %v266 = vadd.f32 0.0, %v265
    %v267 = vpop.f32.mrf.mxu0
    %v268 = vadd.f32 0.0, %v267
    %v269 = vpop.f32.mrf.mxu0
    %v270 = vadd.f32 0.0, %v269
    %v271 = vpop.f32.mrf.mxu0
    %v272 = vadd.f32 0.0, %v271
    %273 = vmatprep.mubr.bf16.mxu0 0
    %274 = vmatmul.mubr.bf16.gmra.mxu0 %v156
    %v275 = vpop.f32.mrf.mxu0
    %v276 = vadd.f32 0.0, %v275
    %v277 = vpop.f32.mrf.mxu0
    %v278 = vadd.f32 0.0, %v277
    %v279 = vpop.f32.mrf.mxu0
    %v280 = vadd.f32 0.0, %v279
    %v281 = vpop.f32.mrf.mxu0
    %v282 = vadd.f32 0.0, %v281
    %283 = vdwg.mxu0
    %284 = vmatprep.subr.bf16.mxu0 0
    %285 = vmatpush1.bf16.msra.mxu0 0
    %286 = vmatprep.subr.bf16.mxu0 0
    %287 = vmatpush1.bf16.msra.mxu0 0
    %288 = vmatprep.subr.bf16.mxu0 0
    %289 = vmatpush1.bf16.msra.mxu0 0
    %290 = vmatprep.subr.bf16.mxu0 0
    %291 = vmatpush1.bf16.msra.mxu0 0
    %292 = vmatprep.subr.bf16.mxu0 0
    %293 = vmatpush1.bf16.msra.mxu0 0
    %294 = vmatprep.subr.bf16.mxu0 0
    %295 = vmatpush1.bf16.msra.mxu0 0
    %296 = vmatprep.subr.bf16.mxu0 0
    %297 = vmatpush1.bf16.msra.mxu0 0
    %298 = vmatprep.subr.bf16.mxu0 %v169
    %299 = vmatpush1.bf16.msra.mxu0 %v166
    %300 = vmatprep.subr.bf16.mxu0 0
    %301 = vmatpush2.bf16.msra.mxu0 0
    %302 = vmatprep.subr.bf16.mxu0 0
    %303 = vmatpush2.bf16.msra.mxu0 0
    %304 = vmatprep.subr.bf16.mxu0 0
    %305 = vmatpush2.bf16.msra.mxu0 0
    %306 = vmatprep.subr.bf16.mxu0 0
    %307 = vmatpush2.bf16.msra.mxu0 0
    %308 = vmatprep.subr.bf16.mxu0 0
    %309 = vmatpush2.bf16.msra.mxu0 0
    %310 = vmatprep.subr.bf16.mxu0 0
    %311 = vmatpush2.bf16.msra.mxu0 0
    %312 = vmatprep.subr.bf16.mxu0 0
    %313 = vmatpush2.bf16.msra.mxu0 0
    %314 = vmatprep.subr.bf16.mxu0 0
    %315 = vmatpush2.bf16.msra.mxu0 0
    %316 = vmatprep.mubr.bf16.mxu0 0
    %317 = vmatmul.mubr.bf16.gmra.mxu0 %v135
    %v318 = vpop.f32.mrf.mxu0
    %v319 = vadd.f32 0.0, %v318
    %v320 = vpop.f32.mrf.mxu0
    %v321 = vadd.f32 0.0, %v320
    %v322 = vpop.f32.mrf.mxu0
    %v323 = vadd.f32 0.0, %v322
    %v324 = vpop.f32.mrf.mxu0
    %v325 = vadd.f32 0.0, %v324
    %326 = vmatprep.mubr.bf16.mxu0 0
    %327 = vmatmul.mubr.bf16.gmra.mxu0 %v138
    %v328 = vpop.f32.mrf.mxu0
    %v329 = vadd.f32 0.0, %v328
    %v330 = vpop.f32.mrf.mxu0
    %v331 = vadd.f32 0.0, %v330
    %v332 = vpop.f32.mrf.mxu0
    %v333 = vadd.f32 0.0, %v332
    %v334 = vpop.f32.mrf.mxu0
    %v335 = vadd.f32 0.0, %v334
    %336 = vmatprep.mubr.bf16.mxu0 0
    %337 = vmatmul.mubr.bf16.gmra.mxu0 %v141
    %v338 = vpop.f32.mrf.mxu0
    %v339 = vadd.f32 0.0, %v338
    %v340 = vpop.f32.mrf.mxu0
    %v341 = vadd.f32 0.0, %v340
    %v342 = vpop.f32.mrf.mxu0
    %v343 = vadd.f32 0.0, %v342
    %v344 = vpop.f32.mrf.mxu0
    %v345 = vadd.f32 0.0, %v344
    %346 = vmatprep.mubr.bf16.mxu0 0
    %347 = vmatmul.mubr.bf16.gmra.mxu0 %v144
    %v348 = vpop.f32.mrf.mxu0
    %v349 = vadd.f32 0.0, %v348
    %v350 = vpop.f32.mrf.mxu0
    %v351 = vadd.f32 0.0, %v350
    %v352 = vpop.f32.mrf.mxu0
    %v353 = vadd.f32 0.0, %v352
    %v354 = vpop.f32.mrf.mxu0
    %v355 = vadd.f32 0.0, %v354
    %356 = vmatprep.mubr.bf16.mxu0 0
    %357 = vmatmul.mubr.bf16.gmra.mxu0 %v147
    %v358 = vpop.f32.mrf.mxu0
    %v359 = vadd.f32 0.0, %v358
    %v360 = vpop.f32.mrf.mxu0
    %v361 = vadd.f32 0.0, %v360
    %v362 = vpop.f32.mrf.mxu0
    %v363 = vadd.f32 0.0, %v362
    %v364 = vpop.f32.mrf.mxu0
    %v365 = vadd.f32 0.0, %v364
    %366 = vmatprep.mubr.bf16.mxu0 0
    %367 = vmatmul.mubr.bf16.gmra.mxu0 %v150
    %v368 = vpop.f32.mrf.mxu0
    %v369 = vadd.f32 0.0, %v368
    %v370 = vpop.f32.mrf.mxu0
    %v371 = vadd.f32 0.0, %v370
    %v372 = vpop.f32.mrf.mxu0
    %v373 = vadd.f32 0.0, %v372
    %v374 = vpop.f32.mrf.mxu0
    %v375 = vadd.f32 0.0, %v374
    %376 = vmatprep.mubr.bf16.mxu0 0
    %377 = vmatmul.mubr.bf16.gmra.mxu0 %v153
    %v378 = vpop.f32.mrf.mxu0
    %v379 = vadd.f32 0.0, %v378
    %v380 = vpop.f32.mrf.mxu0
    %v381 = vadd.f32 0.0, %v380
    %v382 = vpop.f32.mrf.mxu0
    %v383 = vadd.f32 0.0, %v382
    %v384 = vpop.f32.mrf.mxu0
    %v385 = vadd.f32 0.0, %v384
    %386 = vmatprep.mubr.bf16.mxu0 0
    %387 = vmatmul.mubr.bf16.gmra.mxu0 %v156
    %v388 = vpop.f32.mrf.mxu0
    %v389 = vadd.f32 0.0, %v388
    %v390 = vpop.f32.mrf.mxu0
    %v391 = vadd.f32 0.0, %v390
    %v392 = vpop.f32.mrf.mxu0
    %v393 = vadd.f32 0.0, %v392
    %v394 = vpop.f32.mrf.mxu0
    %v395 = vadd.f32 0.0, %v394
    %396 = vdwg.mxu0
    %v397 = vmax.f32 %v206, 0.0
    %v398 = vmax.f32 %v208, 0.0
    %v399 = vmax.f32 %v319, 0.0
    %v400 = vmax.f32 %v321, 0.0
    %v401 = vmax.f32 %v210, 0.0
    %v402 = vmax.f32 %v212, 0.0
    %v403 = vmax.f32 %v323, 0.0
    %v404 = vmax.f32 %v325, 0.0
    %v405 = vmax.f32 %v216, 0.0
    %v406 = vmax.f32 %v218, 0.0
    %v407 = vmax.f32 %v329, 0.0
    %v408 = vmax.f32 %v331, 0.0
    %v409 = vmax.f32 %v220, 0.0
    %v410 = vmax.f32 %v222, 0.0
    %v411 = vmax.f32 %v333, 0.0
    %v412 = vmax.f32 %v335, 0.0
    %v413 = vmax.f32 %v226, 0.0
    %v414 = vmax.f32 %v228, 0.0
    %v415 = vmax.f32 %v339, 0.0
    %v416 = vmax.f32 %v341, 0.0
    %v417 = vmax.f32 %v230, 0.0
    %v418 = vmax.f32 %v232, 0.0
    %v419 = vmax.f32 %v343, 0.0
    %v420 = vmax.f32 %v345, 0.0
    %v421 = vmax.f32 %v236, 0.0
    %v422 = vmax.f32 %v238, 0.0
    %v423 = vmax.f32 %v349, 0.0
    %v424 = vmax.f32 %v351, 0.0
    %v425 = vmax.f32 %v240, 0.0
    %v426 = vmax.f32 %v242, 0.0
    %v427 = vmax.f32 %v353, 0.0
    %v428 = vmax.f32 %v355, 0.0
    %v429 = vmax.f32 %v246, 0.0
    %v430 = vmax.f32 %v248, 0.0
    %v431 = vmax.f32 %v359, 0.0
    %v432 = vmax.f32 %v361, 0.0
    %v433 = vmax.f32 %v250, 0.0
    %v434 = vmax.f32 %v252, 0.0
    %v435 = vmax.f32 %v363, 0.0
    %v436 = vmax.f32 %v365, 0.0
    %v437 = vmax.f32 %v256, 0.0
    %v438 = vmax.f32 %v258, 0.0
    %v439 = vmax.f32 %v369, 0.0
    %v440 = vmax.f32 %v371, 0.0
    %v441 = vmax.f32 %v260, 0.0
    %v442 = vmax.f32 %v262, 0.0
    %v443 = vmax.f32 %v373, 0.0
    %v444 = vmax.f32 %v375, 0.0
    %v445 = vmax.f32 %v266, 0.0
    %v446 = vmax.f32 %v268, 0.0
    %v447 = vmax.f32 %v379, 0.0
    %v448 = vmax.f32 %v381, 0.0
    %v449 = vmax.f32 %v270, 0.0
    %v450 = vmax.f32 %v272, 0.0
    %v451 = vmax.f32 %v383, 0.0
    %v452 = vmax.f32 %v385, 0.0
    %v453 = vmax.f32 %v276, 0.0
    %v454 = vmax.f32 %v278, 0.0
    %v455 = vmax.f32 %v389, 0.0
    %v456 = vmax.f32 %v391, 0.0
    %v457 = vmax.f32 %v280, 0.0
    %v458 = vmax.f32 %v282, 0.0
    %v459 = vmax.f32 %v393, 0.0
    %v460 = vmax.f32 %v395, 0.0
    %v461 = vpack.c.bf16 %v401, %v397
    %v462 = vpack.c.bf16 %v402, %v398
    %v463 = vpack.c.bf16 %v403, %v399
    %v464 = vpack.c.bf16 %v404, %v400
    %v465 = vpack.c.bf16 %v409, %v405
    %v466 = vpack.c.bf16 %v410, %v406
    %v467 = vpack.c.bf16 %v411, %v407
    %v468 = vpack.c.bf16 %v412, %v408
    %v469 = vpack.c.bf16 %v417, %v413
    %v470 = vpack.c.bf16 %v418, %v414
    %v471 = vpack.c.bf16 %v419, %v415
    %v472 = vpack.c.bf16 %v420, %v416
    %v473 = vpack.c.bf16 %v425, %v421
    %v474 = vpack.c.bf16 %v426, %v422
    %v475 = vpack.c.bf16 %v427, %v423
    %v476 = vpack.c.bf16 %v428, %v424
    %v477 = vpack.c.bf16 %v433, %v429
    %v478 = vpack.c.bf16 %v434, %v430
    %v479 = vpack.c.bf16 %v435, %v431
    %v480 = vpack.c.bf16 %v436, %v432
    %v481 = vpack.c.bf16 %v441, %v437
    %v482 = vpack.c.bf16 %v442, %v438
    %v483 = vpack.c.bf16 %v443, %v439
    %v484 = vpack.c.bf16 %v444, %v440
    %v485 = vpack.c.bf16 %v449, %v445
    %v486 = vpack.c.bf16 %v450, %v446
    %v487 = vpack.c.bf16 %v451, %v447
    %v488 = vpack.c.bf16 %v452, %v448
    %v489 = vpack.c.bf16 %v457, %v453
    %v490 = vpack.c.bf16 %v458, %v454
    %v491 = vpack.c.bf16 %v459, %v455
    %v492 = vpack.c.bf16 %v460, %v456
    %v493 = vld [vmem:[%s5] sm:$0xf]
    %v494 = vld [vmem:[%s5 + $0x4] sm:$0xf]
    %v495 = vld [vmem:[%s5 + $0x8] sm:$0xf]
    %v496 = vld [vmem:[%s5 + $0xc] sm:$0xf]
    %v497 = vld [vmem:[%s5 + $0x10] sm:$0xf]
    %v498 = vld [vmem:[%s5 + $0x14] sm:$0xf]
    %v499 = vld [vmem:[%s5 + $0x18] sm:$0xf]
    %v500 = vld [vmem:[%s5 + $0x1c] sm:$0xf]
    %v501 = vld [vmem:[%s5 + $0x20] sm:$0xf]
    %v502 = vld [vmem:[%s5 + $0x24] sm:$0xf]
    %v503 = vld [vmem:[%s5 + $0x28] sm:$0xf]
    %v504 = vld [vmem:[%s5 + $0x2c] sm:$0xf]
    %v505 = vld [vmem:[%s5 + $0x30] sm:$0xf]
    %v506 = vld [vmem:[%s5 + $0x34] sm:$0xf]
    %v507 = vld [vmem:[%s5 + $0x38] sm:$0xf]
    %v508 = vld [vmem:[%s5 + $0x3c] sm:$0xf]
    %v509 = vld [vmem:[%s6] sm:$0xff]
    %v510 = vld [vmem:[%s6 + $0x8] sm:$0xff]
    %v511 = vld [vmem:[%s6 + $0x10] sm:$0xff]
    %v512 = vld [vmem:[%s6 + $0x18] sm:$0xff]
    %v513 = vld [vmem:[%s6 + $0x20] sm:$0xff]
    %v514 = vld [vmem:[%s6 + $0x28] sm:$0xff]
    %v515 = vld [vmem:[%s6 + $0x30] sm:$0xff]
    %v516 = vld [vmem:[%s6 + $0x38] sm:$0xff]
    %v517 = vld [vmem:[%s6 + $0x40] sm:$0xff]
    %v518 = vld [vmem:[%s6 + $0x48] sm:$0xff]
    %v519 = vld [vmem:[%s6 + $0x50] sm:$0xff]
    %v520 = vld [vmem:[%s6 + $0x58] sm:$0xff]
    %v521 = vld [vmem:[%s6 + $0x60] sm:$0xff]
    %v522 = vld [vmem:[%s6 + $0x68] sm:$0xff]
    %v523 = vld [vmem:[%s6 + $0x70] sm:$0xff]
    %v524 = vld [vmem:[%s6 + $0x78] sm:$0xff]
    %526 = vset.pattern.permute.xlu0 0
    %527 = vperm.xlu0 %526, %v509
    %v528 = vpop.permute.xlu0 %527
    %531 = vset.pattern.permute.xlu0 0
    %532 = vperm.xlu0 %531, %v510
    %v533 = vpop.permute.xlu0 %532
    %536 = vset.pattern.permute.xlu0 0
    %537 = vperm.xlu0 %536, %v511
    %v538 = vpop.permute.xlu0 %537
    %541 = vset.pattern.permute.xlu0 0
    %542 = vperm.xlu0 %541, %v512
    %v543 = vpop.permute.xlu0 %542
    %546 = vset.pattern.permute.xlu0 0
    %547 = vperm.xlu0 %546, %v513
    %v548 = vpop.permute.xlu0 %547
    %551 = vset.pattern.permute.xlu0 0
    %552 = vperm.xlu0 %551, %v514
    %v553 = vpop.permute.xlu0 %552
    %556 = vset.pattern.permute.xlu0 0
    %557 = vperm.xlu0 %556, %v515
    %v558 = vpop.permute.xlu0 %557
    %561 = vset.pattern.permute.xlu0 0
    %562 = vperm.xlu0 %561, %v516
    %v563 = vpop.permute.xlu0 %562
    %566 = vset.pattern.permute.xlu0 0
    %567 = vperm.xlu0 %566, %v517
    %v568 = vpop.permute.xlu0 %567
    %571 = vset.pattern.permute.xlu0 0
    %572 = vperm.xlu0 %571, %v518
    %v573 = vpop.permute.xlu0 %572
    %576 = vset.pattern.permute.xlu0 0
    %577 = vperm.xlu0 %576, %v519
    %v578 = vpop.permute.xlu0 %577
    %581 = vset.pattern.permute.xlu0 0
    %582 = vperm.xlu0 %581, %v520
    %v583 = vpop.permute.xlu0 %582
    %586 = vset.pattern.permute.xlu0 0
    %587 = vperm.xlu0 %586, %v521
    %v588 = vpop.permute.xlu0 %587
    %591 = vset.pattern.permute.xlu0 0
    %592 = vperm.xlu0 %591, %v522
    %v593 = vpop.permute.xlu0 %592
    %596 = vset.pattern.permute.xlu0 0
    %597 = vperm.xlu0 %596, %v523
    %v598 = vpop.permute.xlu0 %597
    %601 = vset.pattern.permute.xlu0 0
    %602 = vperm.xlu0 %601, %v524
    %v603 = vpop.permute.xlu0 %602
    %v621 = vunpack.c.l.b16 %v493
    %v622 = vunpack.c.l.b16 %v494
    %v623 = vunpack.c.l.b16 %v495
    %v624 = vunpack.c.l.b16 %v496
    %v625 = vunpack.c.l.b16 %v497
    %v626 = vunpack.c.l.b16 %v498
    %v627 = vunpack.c.l.b16 %v499
    %v628 = vunpack.c.l.b16 %v500
    %v629 = vunpack.c.l.b16 %v501
    %v630 = vunpack.c.l.b16 %v502
    %v631 = vunpack.c.l.b16 %v503
    %v632 = vunpack.c.l.b16 %v504
    %v633 = vunpack.c.l.b16 %v505
    %v634 = vunpack.c.l.b16 %v506
    %v635 = vunpack.c.l.b16 %v507
    %v636 = vunpack.c.l.b16 %v508
    %v637 = vpack.c.b16 %v622, %v621
    %v638 = vpack.c.b16 %v624, %v623
    %v639 = vpack.c.b16 %v626, %v625
    %v640 = vpack.c.b16 %v628, %v627
    %v641 = vpack.c.b16 %v630, %v629
    %v642 = vpack.c.b16 %v632, %v631
    %v643 = vpack.c.b16 %v634, %v633
    %v644 = vpack.c.b16 %v636, %v635
    %653 = vmatprep.subr.bf16.mxu0 %v490
    %654 = vmatpush1.bf16.msra.mxu0 %v489
    %655 = vmatprep.subr.bf16.mxu0 %v486
    %656 = vmatpush1.bf16.msra.mxu0 %v485
    %657 = vmatprep.subr.bf16.mxu0 %v482
    %658 = vmatpush1.bf16.msra.mxu0 %v481
    %659 = vmatprep.subr.bf16.mxu0 %v478
    %660 = vmatpush1.bf16.msra.mxu0 %v477
    %661 = vmatprep.subr.bf16.mxu0 %v474
    %662 = vmatpush1.bf16.msra.mxu0 %v473
    %663 = vmatprep.subr.bf16.mxu0 %v470
    %664 = vmatpush1.bf16.msra.mxu0 %v469
    %665 = vmatprep.subr.bf16.mxu0 %v466
    %666 = vmatpush1.bf16.msra.mxu0 %v465
    %667 = vmatprep.subr.bf16.mxu0 %v462
    %668 = vmatpush1.bf16.msra.mxu0 %v461
    %669 = vmatprep.subr.bf16.mxu0 0
    %670 = vmatpush2.bf16.msra.mxu0 0
    %671 = vmatprep.subr.bf16.mxu0 0
    %672 = vmatpush2.bf16.msra.mxu0 0
    %673 = vmatprep.subr.bf16.mxu0 0
    %674 = vmatpush2.bf16.msra.mxu0 0
    %675 = vmatprep.subr.bf16.mxu0 0
    %676 = vmatpush2.bf16.msra.mxu0 0
    %677 = vmatprep.subr.bf16.mxu0 0
    %678 = vmatpush2.bf16.msra.mxu0 0
    %679 = vmatprep.subr.bf16.mxu0 0
    %680 = vmatpush2.bf16.msra.mxu0 0
    %681 = vmatprep.subr.bf16.mxu0 0
    %682 = vmatpush2.bf16.msra.mxu0 0
    %683 = vmatprep.subr.bf16.mxu0 0
    %684 = vmatpush2.bf16.msra.mxu0 0
    %685 = vmatprep.mubr.bf16.mxu0 0
    %686 = vmatmul.mubr.bf16.gmra.mxu0 %v637
    %v687 = vpop.f32.mrf.mxu0
    %v688 = vadd.f32 %v528, %v687
    %v689 = vpop.f32.mrf.mxu0
    %v690 = vadd.f32 %v528, %v689
    %v691 = vpop.f32.mrf.mxu0
    %v692 = vadd.f32 %v533, %v691
    %v693 = vpop.f32.mrf.mxu0
    %v694 = vadd.f32 %v533, %v693
    %695 = vmatprep.mubr.bf16.mxu0 0
    %696 = vmatmul.mubr.bf16.gmra.mxu0 %v638
    %v697 = vpop.f32.mrf.mxu0
    %v698 = vadd.f32 %v538, %v697
    %v699 = vpop.f32.mrf.mxu0
    %v700 = vadd.f32 %v538, %v699
    %v701 = vpop.f32.mrf.mxu0
    %v702 = vadd.f32 %v543, %v701
    %v703 = vpop.f32.mrf.mxu0
    %v704 = vadd.f32 %v543, %v703
    %705 = vmatprep.mubr.bf16.mxu0 0
    %706 = vmatmul.mubr.bf16.gmra.mxu0 %v639
    %v707 = vpop.f32.mrf.mxu0
    %v708 = vadd.f32 %v548, %v707
    %v709 = vpop.f32.mrf.mxu0
    %v710 = vadd.f32 %v548, %v709
    %v711 = vpop.f32.mrf.mxu0
    %v712 = vadd.f32 %v553, %v711
    %v713 = vpop.f32.mrf.mxu0
    %v714 = vadd.f32 %v553, %v713
    %715 = vmatprep.mubr.bf16.mxu0 0
    %716 = vmatmul.mubr.bf16.gmra.mxu0 %v640
    %v717 = vpop.f32.mrf.mxu0
    %v718 = vadd.f32 %v558, %v717
    %v719 = vpop.f32.mrf.mxu0
    %v720 = vadd.f32 %v558, %v719
    %v721 = vpop.f32.mrf.mxu0
    %v722 = vadd.f32 %v563, %v721
    %v723 = vpop.f32.mrf.mxu0
    %v724 = vadd.f32 %v563, %v723
    %725 = vmatprep.mubr.bf16.mxu0 0
    %726 = vmatmul.mubr.bf16.gmra.mxu0 %v641
    %v727 = vpop.f32.mrf.mxu0
    %v728 = vadd.f32 %v568, %v727
    %v729 = vpop.f32.mrf.mxu0
    %v730 = vadd.f32 %v568, %v729
    %v731 = vpop.f32.mrf.mxu0
    %v732 = vadd.f32 %v573, %v731
    %v733 = vpop.f32.mrf.mxu0
    %v734 = vadd.f32 %v573, %v733
    %735 = vmatprep.mubr.bf16.mxu0 0
    %736 = vmatmul.mubr.bf16.gmra.mxu0 %v642
    %v737 = vpop.f32.mrf.mxu0
    %v738 = vadd.f32 %v578, %v737
    %v739 = vpop.f32.mrf.mxu0
    %v740 = vadd.f32 %v578, %v739
    %v741 = vpop.f32.mrf.mxu0
    %v742 = vadd.f32 %v583, %v741
    %v743 = vpop.f32.mrf.mxu0
    %v744 = vadd.f32 %v583, %v743
    %745 = vmatprep.mubr.bf16.mxu0 0
    %746 = vmatmul.mubr.bf16.gmra.mxu0 %v643
    %v747 = vpop.f32.mrf.mxu0
    %v748 = vadd.f32 %v588, %v747
    %v749 = vpop.f32.mrf.mxu0
    %v750 = vadd.f32 %v588, %v749
    %v751 = vpop.f32.mrf.mxu0
    %v752 = vadd.f32 %v593, %v751
    %v753 = vpop.f32.mrf.mxu0
    %v754 = vadd.f32 %v593, %v753
    %755 = vmatprep.mubr.bf16.mxu0 0
    %756 = vmatmul.mubr.bf16.gmra.mxu0 %v644
    %v757 = vpop.f32.mrf.mxu0
    %v758 = vadd.f32 %v598, %v757
    %v759 = vpop.f32.mrf.mxu0
    %v760 = vadd.f32 %v598, %v759
    %v761 = vpop.f32.mrf.mxu0
    %v762 = vadd.f32 %v603, %v761
    %v763 = vpop.f32.mrf.mxu0
    %v764 = vadd.f32 %v603, %v763
    %765 = vdwg.mxu0
    %766 = vmatprep.subr.bf16.mxu0 %v492
    %767 = vmatpush1.bf16.msra.mxu0 %v491
    %768 = vmatprep.subr.bf16.mxu0 %v488
    %769 = vmatpush1.bf16.msra.mxu0 %v487
    %770 = vmatprep.subr.bf16.mxu0 %v484
    %771 = vmatpush1.bf16.msra.mxu0 %v483
    %772 = vmatprep.subr.bf16.mxu0 %v480
    %773 = vmatpush1.bf16.msra.mxu0 %v479
    %774 = vmatprep.subr.bf16.mxu0 %v476
    %775 = vmatpush1.bf16.msra.mxu0 %v475
    %776 = vmatprep.subr.bf16.mxu0 %v472
    %777 = vmatpush1.bf16.msra.mxu0 %v471
    %778 = vmatprep.subr.bf16.mxu0 %v468
    %779 = vmatpush1.bf16.msra.mxu0 %v467
    %780 = vmatprep.subr.bf16.mxu0 %v464
    %781 = vmatpush1.bf16.msra.mxu0 %v463
    %782 = vmatprep.subr.bf16.mxu0 0
    %783 = vmatpush2.bf16.msra.mxu0 0
    %784 = vmatprep.subr.bf16.mxu0 0
    %785 = vmatpush2.bf16.msra.mxu0 0
    %786 = vmatprep.subr.bf16.mxu0 0
    %787 = vmatpush2.bf16.msra.mxu0 0
    %788 = vmatprep.subr.bf16.mxu0 0
    %789 = vmatpush2.bf16.msra.mxu0 0
    %790 = vmatprep.subr.bf16.mxu0 0
    %791 = vmatpush2.bf16.msra.mxu0 0
    %792 = vmatprep.subr.bf16.mxu0 0
    %793 = vmatpush2.bf16.msra.mxu0 0
    %794 = vmatprep.subr.bf16.mxu0 0
    %795 = vmatpush2.bf16.msra.mxu0 0
    %796 = vmatprep.subr.bf16.mxu0 0
    %797 = vmatpush2.bf16.msra.mxu0 0
    %798 = vmatprep.mubr.bf16.mxu0 0
    %799 = vmatmul.mubr.bf16.gmra.mxu0 %v637
    %v800 = vpop.f32.mrf.mxu0
    %v801 = vadd.f32 %v528, %v800
    %v802 = vpop.f32.mrf.mxu0
    %v803 = vadd.f32 %v528, %v802
    %v804 = vpop.f32.mrf.mxu0
    %v805 = vadd.f32 %v533, %v804
    %v806 = vpop.f32.mrf.mxu0
    %v807 = vadd.f32 %v533, %v806
    %808 = vmatprep.mubr.bf16.mxu0 0
    %809 = vmatmul.mubr.bf16.gmra.mxu0 %v638
    %v810 = vpop.f32.mrf.mxu0
    %v811 = vadd.f32 %v538, %v810
    %v812 = vpop.f32.mrf.mxu0
    %v813 = vadd.f32 %v538, %v812
    %v814 = vpop.f32.mrf.mxu0
    %v815 = vadd.f32 %v543, %v814
    %v816 = vpop.f32.mrf.mxu0
    %v817 = vadd.f32 %v543, %v816
    %818 = vmatprep.mubr.bf16.mxu0 0
    %819 = vmatmul.mubr.bf16.gmra.mxu0 %v639
    %v820 = vpop.f32.mrf.mxu0
    %v821 = vadd.f32 %v548, %v820
    %v822 = vpop.f32.mrf.mxu0
    %v823 = vadd.f32 %v548, %v822
    %v824 = vpop.f32.mrf.mxu0
    %v825 = vadd.f32 %v553, %v824
    %v826 = vpop.f32.mrf.mxu0
    %v827 = vadd.f32 %v553, %v826
    %828 = vmatprep.mubr.bf16.mxu0 0
    %829 = vmatmul.mubr.bf16.gmra.mxu0 %v640
    %v830 = vpop.f32.mrf.mxu0
    %v831 = vadd.f32 %v558, %v830
    %v832 = vpop.f32.mrf.mxu0
    %v833 = vadd.f32 %v558, %v832
    %v834 = vpop.f32.mrf.mxu0
    %v835 = vadd.f32 %v563, %v834
    %v836 = vpop.f32.mrf.mxu0
    %v837 = vadd.f32 %v563, %v836
    %838 = vmatprep.mubr.bf16.mxu0 0
    %839 = vmatmul.mubr.bf16.gmra.mxu0 %v641
    %v840 = vpop.f32.mrf.mxu0
    %v841 = vadd.f32 %v568, %v840
    %v842 = vpop.f32.mrf.mxu0
    %v843 = vadd.f32 %v568, %v842
    %v844 = vpop.f32.mrf.mxu0
    %v845 = vadd.f32 %v573, %v844
    %v846 = vpop.f32.mrf.mxu0
    %v847 = vadd.f32 %v573, %v846
    %848 = vmatprep.mubr.bf16.mxu0 0
    %849 = vmatmul.mubr.bf16.gmra.mxu0 %v642
    %v850 = vpop.f32.mrf.mxu0
    %v851 = vadd.f32 %v578, %v850
    %v852 = vpop.f32.mrf.mxu0
    %v853 = vadd.f32 %v578, %v852
    %v854 = vpop.f32.mrf.mxu0
    %v855 = vadd.f32 %v583, %v854
    %v856 = vpop.f32.mrf.mxu0
    %v857 = vadd.f32 %v583, %v856
    %858 = vmatprep.mubr.bf16.mxu0 0
    %859 = vmatmul.mubr.bf16.gmra.mxu0 %v643
    %v860 = vpop.f32.mrf.mxu0
    %v861 = vadd.f32 %v588, %v860
    %v862 = vpop.f32.mrf.mxu0
    %v863 = vadd.f32 %v588, %v862
    %v864 = vpop.f32.mrf.mxu0
    %v865 = vadd.f32 %v593, %v864
    %v866 = vpop.f32.mrf.mxu0
    %v867 = vadd.f32 %v593, %v866
    %868 = vmatprep.mubr.bf16.mxu0 0
    %869 = vmatmul.mubr.bf16.gmra.mxu0 %v644
    %v870 = vpop.f32.mrf.mxu0
    %v871 = vadd.f32 %v598, %v870
    %v872 = vpop.f32.mrf.mxu0
    %v873 = vadd.f32 %v598, %v872
    %v874 = vpop.f32.mrf.mxu0
    %v875 = vadd.f32 %v603, %v874
    %v876 = vpop.f32.mrf.mxu0
    %v877 = vadd.f32 %v603, %v876
    %878 = vdwg.mxu0
    %v879 = vmax.f32 %v688, 0.0
    %v880 = vmax.f32 %v690, 0.0
    %v881 = vmax.f32 %v801, 0.0
    %v882 = vmax.f32 %v803, 0.0
    %v883 = vmax.f32 %v692, 0.0
    %v884 = vmax.f32 %v694, 0.0
    %v885 = vmax.f32 %v805, 0.0
    %v886 = vmax.f32 %v807, 0.0
    %v887 = vmax.f32 %v698, 0.0
    %v888 = vmax.f32 %v700, 0.0
    %v889 = vmax.f32 %v811, 0.0
    %v890 = vmax.f32 %v813, 0.0
    %v891 = vmax.f32 %v702, 0.0
    %v892 = vmax.f32 %v704, 0.0
    %v893 = vmax.f32 %v815, 0.0
    %v894 = vmax.f32 %v817, 0.0
    %v895 = vmax.f32 %v708, 0.0
    %v896 = vmax.f32 %v710, 0.0
    %v897 = vmax.f32 %v821, 0.0
    %v898 = vmax.f32 %v823, 0.0
    %v899 = vmax.f32 %v712, 0.0
    %v900 = vmax.f32 %v714, 0.0
    %v901 = vmax.f32 %v825, 0.0
    %v902 = vmax.f32 %v827, 0.0
    %v903 = vmax.f32 %v718, 0.0
    %v904 = vmax.f32 %v720, 0.0
    %v905 = vmax.f32 %v831, 0.0
    %v906 = vmax.f32 %v833, 0.0
    %v907 = vmax.f32 %v722, 0.0
    %v908 = vmax.f32 %v724, 0.0
    %v909 = vmax.f32 %v835, 0.0
    %v910 = vmax.f32 %v837, 0.0
    %v911 = vmax.f32 %v728, 0.0
    %v912 = vmax.f32 %v730, 0.0
    %v913 = vmax.f32 %v841, 0.0
    %v914 = vmax.f32 %v843, 0.0
    %v915 = vmax.f32 %v732, 0.0
    %v916 = vmax.f32 %v734, 0.0
    %v917 = vmax.f32 %v845, 0.0
    %v918 = vmax.f32 %v847, 0.0
    %v919 = vmax.f32 %v738, 0.0
    %v920 = vmax.f32 %v740, 0.0
    %v921 = vmax.f32 %v851, 0.0
    %v922 = vmax.f32 %v853, 0.0
    %v923 = vmax.f32 %v742, 0.0
    %v924 = vmax.f32 %v744, 0.0
    %v925 = vmax.f32 %v855, 0.0
    %v926 = vmax.f32 %v857, 0.0
    %v927 = vmax.f32 %v748, 0.0
    %v928 = vmax.f32 %v750, 0.0
    %v929 = vmax.f32 %v861, 0.0
    %v930 = vmax.f32 %v863, 0.0
    %v931 = vmax.f32 %v752, 0.0
    %v932 = vmax.f32 %v754, 0.0
    %v933 = vmax.f32 %v865, 0.0
    %v934 = vmax.f32 %v867, 0.0
    %v935 = vmax.f32 %v758, 0.0
    %v936 = vmax.f32 %v760, 0.0
    %v937 = vmax.f32 %v871, 0.0
    %v938 = vmax.f32 %v873, 0.0
    %v939 = vmax.f32 %v762, 0.0
    %v940 = vmax.f32 %v764, 0.0
    %v941 = vmax.f32 %v875, 0.0
    %v942 = vmax.f32 %v877, 0.0
    %v943 = vld [vmem:[%s7] sm:$0xff]
    %v944 = vld [vmem:[%s7 + $0x8] sm:$0xff]
    %v945 = vld [vmem:[%s7 + $0x10] sm:$0xff]
    %v946 = vld [vmem:[%s7 + $0x18] sm:$0xff]
    %v947 = vld [vmem:[%s7 + $0x20] sm:$0xff]
    %v948 = vld [vmem:[%s7 + $0x28] sm:$0xff]
    %v949 = vld [vmem:[%s7 + $0x30] sm:$0xff]
    %v950 = vld [vmem:[%s7 + $0x38] sm:$0xff]
    %v951 = vld [vmem:[%s7 + $0x40] sm:$0xff]
    %v952 = vld [vmem:[%s7 + $0x48] sm:$0xff]
    %v953 = vld [vmem:[%s7 + $0x50] sm:$0xff]
    %v954 = vld [vmem:[%s7 + $0x58] sm:$0xff]
    %v955 = vld [vmem:[%s7 + $0x60] sm:$0xff]
    %v956 = vld [vmem:[%s7 + $0x68] sm:$0xff]
    %v957 = vld [vmem:[%s7 + $0x70] sm:$0xff]
    %v958 = vld [vmem:[%s7 + $0x78] sm:$0xff]
    %960 = vset.pattern.permute.xlu0 0
    %961 = vperm.xlu0 %960, %v943
    %v962 = vpop.permute.xlu0 %961
    %965 = vset.pattern.permute.xlu0 0
    %966 = vperm.xlu0 %965, %v944
    %v967 = vpop.permute.xlu0 %966
    %970 = vset.pattern.permute.xlu0 0
    %971 = vperm.xlu0 %970, %v945
    %v972 = vpop.permute.xlu0 %971
    %975 = vset.pattern.permute.xlu0 0
    %976 = vperm.xlu0 %975, %v946
    %v977 = vpop.permute.xlu0 %976
    %980 = vset.pattern.permute.xlu0 0
    %981 = vperm.xlu0 %980, %v947
    %v982 = vpop.permute.xlu0 %981
    %985 = vset.pattern.permute.xlu0 0
    %986 = vperm.xlu0 %985, %v948
    %v987 = vpop.permute.xlu0 %986
    %990 = vset.pattern.permute.xlu0 0
    %991 = vperm.xlu0 %990, %v949
    %v992 = vpop.permute.xlu0 %991
    %995 = vset.pattern.permute.xlu0 0
    %996 = vperm.xlu0 %995, %v950
    %v997 = vpop.permute.xlu0 %996
    %1000 = vset.pattern.permute.xlu0 0
    %1001 = vperm.xlu0 %1000, %v951
    %v1002 = vpop.permute.xlu0 %1001
    %1005 = vset.pattern.permute.xlu0 0
    %1006 = vperm.xlu0 %1005, %v952
    %v1007 = vpop.permute.xlu0 %1006
    %1010 = vset.pattern.permute.xlu0 0
    %1011 = vperm.xlu0 %1010, %v953
    %v1012 = vpop.permute.xlu0 %1011
    %1015 = vset.pattern.permute.xlu0 0
    %1016 = vperm.xlu0 %1015, %v954
    %v1017 = vpop.permute.xlu0 %1016
    %1020 = vset.pattern.permute.xlu0 0
    %1021 = vperm.xlu0 %1020, %v955
    %v1022 = vpop.permute.xlu0 %1021
    %1025 = vset.pattern.permute.xlu0 0
    %1026 = vperm.xlu0 %1025, %v956
    %v1027 = vpop.permute.xlu0 %1026
    %1030 = vset.pattern.permute.xlu0 0
    %1031 = vperm.xlu0 %1030, %v957
    %v1032 = vpop.permute.xlu0 %1031
    %1035 = vset.pattern.permute.xlu0 0
    %1036 = vperm.xlu0 %1035, %v958
    %v1037 = vpop.permute.xlu0 %1036
    %v1039 = vmul.f32 %v879, %v962
    %v1040 = vmul.f32 %v880, %v962
    %v1041 = vmul.f32 %v881, %v962
    %v1042 = vmul.f32 %v882, %v962
    %v1043 = vmul.f32 %v883, %v967
    %v1044 = vmul.f32 %v884, %v967
    %v1045 = vmul.f32 %v885, %v967
    %v1046 = vmul.f32 %v886, %v967
    %v1047 = vmul.f32 %v887, %v972
    %v1048 = vmul.f32 %v888, %v972
    %v1049 = vmul.f32 %v889, %v972
    %v1050 = vmul.f32 %v890, %v972
    %v1051 = vmul.f32 %v891, %v977
    %v1052 = vmul.f32 %v892, %v977
    %v1053 = vmul.f32 %v893, %v977
    %v1054 = vmul.f32 %v894, %v977
    %v1055 = vmul.f32 %v895, %v982
    %v1056 = vmul.f32 %v896, %v982
    %v1057 = vmul.f32 %v897, %v982
    %v1058 = vmul.f32 %v898, %v982
    %v1059 = vmul.f32 %v899, %v987
    %v1060 = vmul.f32 %v900, %v987
    %v1061 = vmul.f32 %v901, %v987
    %v1062 = vmul.f32 %v902, %v987
    %v1063 = vmul.f32 %v903, %v992
    %v1064 = vmul.f32 %v904, %v992
    %v1065 = vmul.f32 %v905, %v992
    %v1066 = vmul.f32 %v906, %v992
    %v1067 = vmul.f32 %v907, %v997
    %v1068 = vmul.f32 %v908, %v997
    %v1069 = vmul.f32 %v909, %v997
    %v1070 = vmul.f32 %v910, %v997
    %v1071 = vmul.f32 %v911, %v1002
    %v1072 = vmul.f32 %v912, %v1002
    %v1073 = vmul.f32 %v913, %v1002
    %v1074 = vmul.f32 %v914, %v1002
    %v1075 = vmul.f32 %v915, %v1007
    %v1076 = vmul.f32 %v916, %v1007
    %v1077 = vmul.f32 %v917, %v1007
    %v1078 = vmul.f32 %v918, %v1007
    %v1079 = vmul.f32 %v919, %v1012
    %v1080 = vmul.f32 %v920, %v1012
    %v1081 = vmul.f32 %v921, %v1012
    %v1082 = vmul.f32 %v922, %v1012
    %v1083 = vmul.f32 %v923, %v1017
    %v1084 = vmul.f32 %v924, %v1017
    %v1085 = vmul.f32 %v925, %v1017
    %v1086 = vmul.f32 %v926, %v1017
    %v1087 = vmul.f32 %v927, %v1022
    %v1088 = vmul.f32 %v928, %v1022
    %v1089 = vmul.f32 %v929, %v1022
    %v1090 = vmul.f32 %v930, %v1022
    %v1091 = vmul.f32 %v931, %v1027
    %v1092 = vmul.f32 %v932, %v1027
    %v1093 = vmul.f32 %v933, %v1027
    %v1094 = vmul.f32 %v934, %v1027
    %v1095 = vmul.f32 %v935, %v1032
    %v1096 = vmul.f32 %v936, %v1032
    %v1097 = vmul.f32 %v937, %v1032
    %v1098 = vmul.f32 %v938, %v1032
    %v1099 = vmul.f32 %v939, %v1037
    %v1100 = vmul.f32 %v940, %v1037
    %v1101 = vmul.f32 %v941, %v1037
    %v1102 = vmul.f32 %v942, %v1037
    %v1103 = vadd.f32 %v1039, %v1043
    %v1104 = vadd.f32 %v1103, %v1047
    %v1105 = vadd.f32 %v1104, %v1051
    %v1106 = vadd.f32 %v1105, %v1055
    %v1107 = vadd.f32 %v1106, %v1059
    %v1108 = vadd.f32 %v1107, %v1063
    %v1109 = vadd.f32 %v1108, %v1067
    %v1110 = vadd.f32 %v1109, %v1071
    %v1111 = vadd.f32 %v1110, %v1075
    %v1112 = vadd.f32 %v1111, %v1079
    %v1113 = vadd.f32 %v1112, %v1083
    %v1114 = vadd.f32 %v1113, %v1087
    %v1115 = vadd.f32 %v1114, %v1091
    %v1116 = vadd.f32 %v1115, %v1095
    %v1117 = vadd.f32 %v1116, %v1099
    %v1118 = vrot.slane %v1117, 4
    %v1119 = vadd.f32 %v1117, %v1118
    %v1120 = vrot.slane %v1119, 2
    %v1121 = vadd.f32 %v1119, %v1120
    %v1122 = vrot.slane %v1121, 1
    %v1123 = vadd.f32 %v1121, %v1122
    %v1124 = vadd.f32 %v1040, %v1044
    %v1125 = vadd.f32 %v1124, %v1048
    %v1126 = vadd.f32 %v1125, %v1052
    %v1127 = vadd.f32 %v1126, %v1056
    %v1128 = vadd.f32 %v1127, %v1060
    %v1129 = vadd.f32 %v1128, %v1064
    %v1130 = vadd.f32 %v1129, %v1068
    %v1131 = vadd.f32 %v1130, %v1072
    %v1132 = vadd.f32 %v1131, %v1076
    %v1133 = vadd.f32 %v1132, %v1080
    %v1134 = vadd.f32 %v1133, %v1084
    %v1135 = vadd.f32 %v1134, %v1088
    %v1136 = vadd.f32 %v1135, %v1092
    %v1137 = vadd.f32 %v1136, %v1096
    %v1138 = vadd.f32 %v1137, %v1100
    %v1139 = vrot.slane %v1138, 4
    %v1140 = vadd.f32 %v1138, %v1139
    %v1141 = vrot.slane %v1140, 2
    %v1142 = vadd.f32 %v1140, %v1141
    %v1143 = vrot.slane %v1142, 1
    %v1144 = vadd.f32 %v1142, %v1143
    %v1145 = vadd.f32 %v1041, %v1045
    %v1146 = vadd.f32 %v1145, %v1049
    %v1147 = vadd.f32 %v1146, %v1053
    %v1148 = vadd.f32 %v1147, %v1057
    %v1149 = vadd.f32 %v1148, %v1061
    %v1150 = vadd.f32 %v1149, %v1065
    %v1151 = vadd.f32 %v1150, %v1069
    %v1152 = vadd.f32 %v1151, %v1073
    %v1153 = vadd.f32 %v1152, %v1077
    %v1154 = vadd.f32 %v1153, %v1081
    %v1155 = vadd.f32 %v1154, %v1085
    %v1156 = vadd.f32 %v1155, %v1089
    %v1157 = vadd.f32 %v1156, %v1093
    %v1158 = vadd.f32 %v1157, %v1097
    %v1159 = vadd.f32 %v1158, %v1101
    %v1160 = vrot.slane %v1159, 4
    %v1161 = vadd.f32 %v1159, %v1160
    %v1162 = vrot.slane %v1161, 2
    %v1163 = vadd.f32 %v1161, %v1162
    %v1164 = vrot.slane %v1163, 1
    %v1165 = vadd.f32 %v1163, %v1164
    %v1166 = vadd.f32 %v1042, %v1046
    %v1167 = vadd.f32 %v1166, %v1050
    %v1168 = vadd.f32 %v1167, %v1054
    %v1169 = vadd.f32 %v1168, %v1058
    %v1170 = vadd.f32 %v1169, %v1062
    %v1171 = vadd.f32 %v1170, %v1066
    %v1172 = vadd.f32 %v1171, %v1070
    %v1173 = vadd.f32 %v1172, %v1074
    %v1174 = vadd.f32 %v1173, %v1078
    %v1175 = vadd.f32 %v1174, %v1082
    %v1176 = vadd.f32 %v1175, %v1086
    %v1177 = vadd.f32 %v1176, %v1090
    %v1178 = vadd.f32 %v1177, %v1094
    %v1179 = vadd.f32 %v1178, %v1098
    %v1180 = vadd.f32 %v1179, %v1102
    %v1181 = vrot.slane %v1180, 4
    %v1182 = vadd.f32 %v1180, %v1181
    %v1183 = vrot.slane %v1182, 2
    %v1184 = vadd.f32 %v1182, %v1183
    %v1185 = vrot.slane %v1184, 1
    %v1186 = vadd.f32 %v1184, %v1185
    %v1187 = vld [vmem:[#allocation3] sm:$0x1]
    %1189 = vset.pattern.permute.xlu0 0
    %1190 = vperm.xlu0 %1189, %v1187
    %v1191 = vpop.permute.xlu0 %1190
    %v1193 = vlaneseq
    %v1194 = vshrl.u32 %v1193, 7
    %v1195 = vsub.s32 0, %v1194
    %v1196 = vrot.slane %v1191, %v1195
    %v1197 = vadd.f32 %v1123, %v1196
    %v1198 = vadd.f32 %v1144, %v1196
    %v1199 = vadd.f32 %v1165, %v1196
    %v1200 = vadd.f32 %v1186, %v1196
    %v1201 = vld [vmem:[%s3] sm:$0xf]
    %vm1202 = vcmp.ne.s32.totalorder %v1201, 0
    %vm1203 = vcmp.gt.f32.partialorder %v1197, 0.0
    %vm1204 = vcmp.gt.f32.partialorder %v1198, 0.0
    %vm1205 = vcmp.gt.f32.partialorder %v1199, 0.0
    %vm1206 = vcmp.gt.f32.partialorder %v1200, 0.0
    %v1207 = vsel %vm1203, 1, 0
    %v1208 = vsel %vm1204, 1, 0
    %v1209 = vsel %vm1205, 1, 0
    %v1210 = vsel %vm1206, 1, 0
    %v1211 = vcombine.low %v1207, %v1208
    %v1212 = vcombine.low %v1209, %v1210
    %v1214 = vunpack.c.l.s4 1966171168
    %v1215 = vunpack.c.0.s8 %v1214
    %v1216 = vlaneseq
    %v1217 = vshrl.u32 %v1216, 7
    %v1218 = vsub.s32 %v1215, %v1217
    %v1219 = vrot.slane %v1211, %v1218
    %v1221 = vunpack.c.l.s4 1966171168
    %v1222 = vunpack.c.0.s8 %v1221
    %v1223 = vlaneseq
    %v1224 = vshrl.u32 %v1223, 7
    %v1225 = vsub.s32 %v1222, %v1224
    %v1226 = vrot.slane %v1212, %v1225
    %v1227 = vcombine.low %v1219, %v1226
    %v1229 = vunpack.c.l.s4 1966171168
    %v1230 = vunpack.c.0.s8 %v1229
    %v1231 = vlaneseq
    %v1232 = vshrl.u32 %v1231, 7
    %v1233 = vsub.s32 %v1230, %v1232
    %v1234 = vrot.slane %v1227, %v1233
    %vm1235 = vcmp.ne.s32.totalorder %v1234, 0
    %vm1236 = vmor %vm1202, %vm1235
    %v1237 = vsel %vm1236, 1, 0
    %1238 = vst.msk [vmem:[#allocation4] sm:$0xf] %vm44, %v1237
    // Predicated region
    $region38: #{tpu_custom_call.1} parent=1 // pred_check
      _
    $region39: #{tpu_custom_call.1} parent=1 // pred_check_branch
      %1240 = sbr.rel (0) target = $region41
    $region40: #{tpu_custom_call.1} parent=1 // pred_region
      %s1242 = ssub.s32 64, 64
      %1243 = vsyncadd [#allocation5], %s1242
      %s1245 = sshll.u32 [#allocation4], 4
      %s1246 = int_to_ptr.vmem [resolvable:$true] %s1245
      %1248 = dma.vmem_to_hbm [thread:$0]  %s1246, 64, %s9, [#allocation5]
    $region41: #{tpu_custom_call.1} parent=1 // pred_fallthru
      _
    // Predicated region
    $region42: #{tpu_custom_call.1} parent=1 // pred_check
      _
    $region43: #{tpu_custom_call.1} parent=1 // pred_check_branch
      %1250 = sbr.rel (0) target = $region45
    $region44: #{tpu_custom_call.1} parent=1 // pred_region
      %1251 = dma.done [#allocation5], 64
    $region45: #{tpu_custom_call.1} parent=1 // pred_fallthru
      _
    %1252 = vsyncpa [#allocation5], 1

</llo_original>
